<compile_context>
chip_gen: v7x
topology: tpu7x:2x2x1
jax: 0.10.0
libtpu: 0.0.40
codegen_flags: <defaults>
</compile_context>

<pallas_src>
import jax
import jax.numpy as jnp
from jax.experimental import pallas as pl
from jax.experimental.pallas import tpu as pltpu


def _cdiv(a: int, b: int) -> int:
    return -(-a // b)


def _round_up(n: int, m: int) -> int:
    return ((n + m - 1) // m) * m


def mlp_kernel(x_ref, w1_ref, b1_ref, w2_ref, b2_ref, o_ref):
    # x_ref : (TBp, P*D_in)  f32   packed: P original rows per packed row
    # w1_ref: (P*D_in, P*H)  bf16  block-diagonal kron(I_P, W1)   (resident)
    # b1_ref: (1, P*H)       f32                                  (resident)
    # w2_ref: (P*H, P*D_out) bf16  block-diagonal kron(I_P, W2)   (resident)
    # b2_ref: (1, P*D_out)   f32                                  (resident)
    # o_ref : (TBp, P*D_out) f32   lane-dense output slab
    x = x_ref[...].astype(jnp.bfloat16)          # in-kernel cast: free under DMA
    h = jnp.dot(x, w1_ref[...], preferred_element_type=jnp.float32)
    h = jnp.maximum(h + b1_ref[...], 0.0)        # bias + ReLU in f32
    out = jnp.dot(h.astype(jnp.bfloat16), w2_ref[...],
                  preferred_element_type=jnp.float32)
    o_ref[...] = (out + b2_ref[...]).astype(o_ref.dtype)


def tabular_model(x, w1, b1, w2, b2, *, block_rows=32768, pack=16):
    """Forward pass of TabularModel: fc2(relu(fc1(x))).

    x  : (B, D_in)   float32
    w1 : (D_in, 32)  float32   (transposed PyTorch fc1.weight)
    b1 : (32,)       float32
    w2 : (32, D_out) float32   (transposed PyTorch fc2.weight)
    b2 : (D_out,)    float32
    returns (B, D_out) float32
    """
    B, D_in = x.shape
    H = w1.shape[1]
    D_out = w2.shape[1]
    P = pack

    # --- structural lane packing: P original rows per packed row ------------
    rem = B % P
    if rem:
        # Rare path: pad so the packing reshape is a pure bitcast. Costs one
        # extra pass over x only when B % P != 0 (no pad at all otherwise).
        x = jnp.pad(x, ((0, P - rem), (0, 0)))
    Bp = x.shape[0]
    Rp = Bp // P                                   # packed rows
    xp = x.reshape(Rp, P * D_in)                   # row-major bitcast, same bytes

    # Block-diagonal replicated weights / tiled biases (tiny, built per call).
    w1_bd = jnp.kron(jnp.eye(P, dtype=w1.dtype), w1).astype(jnp.bfloat16)
    w2_bd = jnp.kron(jnp.eye(P, dtype=w2.dtype), w2).astype(jnp.bfloat16)
    b1_t = jnp.tile(b1.astype(jnp.float32), P).reshape(1, P * H)
    b2_t = jnp.tile(b2.astype(jnp.float32), P).reshape(1, P * D_out)

    # --- batch tile choice ---------------------------------------------------
    tbp_cap = max(block_rows // P, 8)
    if Rp <= 8:
        tbp = Rp                                   # single full-extent block
    else:
        # multiple of 8 sublanes; >=2 grid steps when possible (v7x megacore)
        tbp = min(tbp_cap, _round_up(_cdiv(Rp, 2), 8))
    n_blocks = _cdiv(Rp, tbp)                      # ragged last tile is masked

    out = pl.pallas_call(
        mlp_kernel,
        out_shape=jax.ShapeDtypeStruct((Rp, P * D_out), jnp.float32),
        grid_spec=pl.GridSpec(
            grid=(n_blocks,),
            in_specs=[
                pl.BlockSpec((tbp, P * D_in), lambda i: (i, 0)),     # x tile (pipelined)
                pl.BlockSpec((P * D_in, P * H), lambda i: (0, 0)),   # W1 (resident)
                pl.BlockSpec((1, P * H), lambda i: (0, 0)),          # b1 (resident)
                pl.BlockSpec((P * H, P * D_out), lambda i: (0, 0)),  # W2 (resident)
                pl.BlockSpec((1, P * D_out), lambda i: (0, 0)),      # b2 (resident)
            ],
            out_specs=pl.BlockSpec((tbp, P * D_out), lambda i: (i, 0)),
        ),
        compiler_params=pltpu.CompilerParams(
            dimension_semantics=("parallel",),     # shard batch tiles across TCs on v7x
            vmem_limit_bytes=48 * 1024 * 1024,     # actual use ~13 MiB at max tile
        ),
    )(xp, w1_bd, b1_t, w2_bd, b2_t)

    out = out.reshape(Bp, D_out)                   # bitcast back to (B, D_out)
    return out[:B] if rem else out


def reference_mlp_bf16(x, w1, b1, w2, b2):
    """Reference mirroring the kernel's bf16-operand / f32-accumulate pipeline."""
    xb = x.astype(jnp.bfloat16)
    w1b = w1.astype(jnp.bfloat16)
    w2b = w2.astype(jnp.bfloat16)
    h = jnp.dot(xb, w1b, preferred_element_type=jnp.float32) + b1
    h = jnp.maximum(h, 0.0)
    return jnp.dot(h.astype(jnp.bfloat16), w2b,
                   preferred_element_type=jnp.float32) + b2


def reference_mlp_f32(x, w1, b1, w2, b2):
    h = jnp.maximum(x @ w1 + b1, 0.0)
    return h @ w2 + b2


if __name__ == "__main__":
    # Shapes consistent with the module: hidden=32 is fixed by TabularModel.
    input_dim, hidden, output_dim = 16, 32, 8

    key = jax.random.PRNGKey(0)
    kx1, kw1, kb1, kw2, kb2, kx2, kx3 = jax.random.split(key, 7)

    # PyTorch Linear-style uniform init bounds.
    bound1 = 1.0 / jnp.sqrt(jnp.float32(input_dim))
    w1 = jax.random.uniform(kw1, (input_dim, hidden), jnp.float32, -bound1, bound1)
    b1 = jax.random.uniform(kb1, (hidden,), jnp.float32, -bound1, bound1)
    bound2 = 1.0 / jnp.sqrt(jnp.float32(hidden))
    w2 = jax.random.uniform(kw2, (hidden, output_dim), jnp.float32, -bound2, bound2)
    b2 = jax.random.uniform(kb2, (output_dim,), jnp.float32, -bound2, bound2)

    # jit so the packing reshape / output bitcast stay zero-copy.
    fwd = jax.jit(tabular_model, static_argnames=("block_rows", "pack"))

    # --- Test 1: small batch, divisible by 16 -> single packed tile, no pad.
    x1 = jax.random.normal(kx1, (32, input_dim), dtype=jnp.float32)
    o1 = jax.block_until_ready(fwd(x1, w1, b1, w2, b2))
    assert o1.shape == (32, output_dim)
    assert jnp.allclose(o1, reference_mlp_bf16(x1, w1, b1, w2, b2), atol=2e-3, rtol=2e-3)
    assert jnp.allclose(o1, reference_mlp_f32(x1, w1, b1, w2, b2), atol=5e-2, rtol=5e-2)

    # --- Test 2: 2000 rows (divisible by 16) -> 125 packed rows, 2 grid steps
    # with a ragged (masked) last tile; no pad, no output slice.
    x2 = jax.random.normal(kx2, (2000, input_dim), dtype=jnp.float32)
    o2 = jax.block_until_ready(fwd(x2, w1, b1, w2, b2))
    assert o2.shape == (2000, output_dim)
    assert jnp.allclose(o2, reference_mlp_bf16(x2, w1, b1, w2, b2), atol=2e-3, rtol=2e-3)

    # --- Test 3: batch not divisible by 16 -> exercises the rare pad/slice path.
    x3 = jax.random.normal(kx3, (50, input_dim), dtype=jnp.float32)
    o3 = jax.block_until_ready(fwd(x3, w1, b1, w2, b2))
    assert o3.shape == (50, output_dim)
    assert jnp.allclose(o3, reference_mlp_bf16(x3, w1, b1, w2, b2), atol=2e-3, rtol=2e-3)

    print("KERNEL_OK")
</pallas_src>

<mosaic_0001>
module attributes {stable_mosaic.version = 11 : i64} {
  func.func @mlp_kernel(%arg0: i32, %arg1: memref<2x256xf32, #tpu.memory_space<vmem>>, %arg2: memref<256x512xbf16, #tpu.memory_space<vmem>>, %arg3: memref<1x512xf32, #tpu.memory_space<vmem>>, %arg4: memref<512x128xbf16, #tpu.memory_space<vmem>>, %arg5: memref<1x128xf32, #tpu.memory_space<vmem>>, %arg6: memref<2x128xf32, #tpu.memory_space<vmem>>) attributes {dimension_semantics = [#tpu.dimension_semantics<parallel>], iteration_bounds = array<i64: 1>, scalar_prefetch = 0 : i64, scratch_operands = 0 : i64, tpu.core_type = #tpu.core_type<tc>, window_params = [{transform_indices = @transform_0, window_bounds = array<i64: 2, 256>}, {pipeline_mode = #tpu.pipeline_mode<synchronous>, transform_indices = @transform_1, window_bounds = array<i64: 256, 512>}, {pipeline_mode = #tpu.pipeline_mode<synchronous>, transform_indices = @transform_2, window_bounds = array<i64: 1, 512>}, {pipeline_mode = #tpu.pipeline_mode<synchronous>, transform_indices = @transform_3, window_bounds = array<i64: 512, 128>}, {pipeline_mode = #tpu.pipeline_mode<synchronous>, transform_indices = @transform_4, window_bounds = array<i64: 1, 128>}, {transform_indices = @transform_5, window_bounds = array<i64: 2, 128>}]} {
    %c0 = arith.constant 0 : index
    %c0_0 = arith.constant 0 : index
    %0 = vector.load %arg1[%c0, %c0_0] : memref<2x256xf32, #tpu.memory_space<vmem>>, vector<2x256xf32>
    %1 = arith.truncf %0 : vector<2x256xf32> to vector<2x256xbf16>
    %c0_1 = arith.constant 0 : index
    %c0_2 = arith.constant 0 : index
    %2 = vector.load %arg2[%c0_1, %c0_2] : memref<256x512xbf16, #tpu.memory_space<vmem>>, vector<256x512xbf16>
    %cst = arith.constant dense<0.000000e+00> : vector<2x512xf32>
    %3 = tpu.matmul %1, %2, %cst {dimension_numbers = #tpu.dot_dimension_numbers<[1], [0], [0], [1], [0, 0, 1, 1], [], []>} : vector<2x256xbf16>, vector<256x512xbf16>, vector<2x512xf32> -> vector<2x512xf32>
    %c0_3 = arith.constant 0 : index
    %c0_4 = arith.constant 0 : index
    %4 = vector.load %arg3[%c0_3, %c0_4] : memref<1x512xf32, #tpu.memory_space<vmem>>, vector<1x512xf32>
    %5 = vector.broadcast %4 : vector<1x512xf32> to vector<2x512xf32>
    %6 = arith.addf %3, %5 : vector<2x512xf32>
    %cst_5 = arith.constant 0.000000e+00 : f32
    %7 = vector.broadcast %cst_5 : f32 to vector<2x512xf32>
    %8 = arith.maximumf %6, %7 : vector<2x512xf32>
    %9 = arith.truncf %8 : vector<2x512xf32> to vector<2x512xbf16>
    %c0_6 = arith.constant 0 : index
    %c0_7 = arith.constant 0 : index
    %10 = vector.load %arg4[%c0_6, %c0_7] : memref<512x128xbf16, #tpu.memory_space<vmem>>, vector<512x128xbf16>
    %cst_8 = arith.constant dense<0.000000e+00> : vector<2x128xf32>
    %11 = tpu.matmul %9, %10, %cst_8 {dimension_numbers = #tpu.dot_dimension_numbers<[1], [0], [0], [1], [0, 0, 1, 1], [], []>} : vector<2x512xbf16>, vector<512x128xbf16>, vector<2x128xf32> -> vector<2x128xf32>
    %c0_9 = arith.constant 0 : index
    %c0_10 = arith.constant 0 : index
    %12 = vector.load %arg5[%c0_9, %c0_10] : memref<1x128xf32, #tpu.memory_space<vmem>>, vector<1x128xf32>
    %13 = vector.broadcast %12 : vector<1x128xf32> to vector<2x128xf32>
    %14 = arith.addf %11, %13 : vector<2x128xf32>
    %c0_11 = arith.constant 0 : index
    %c0_12 = arith.constant 0 : index
    %15 = vector.load %arg6[%c0_11, %c0_12] : memref<2x128xf32, #tpu.memory_space<vmem>>, vector<2x128xf32>
    tpu.vector_store %arg6[%c0_11, %c0_12], %14 {strides = array<i32>} : memref<2x128xf32, #tpu.memory_space<vmem>>, vector<2x128xf32>,
    return
  }
  func.func @transform_0(%arg0: i32) -> (i32, i32) {
    %c0_i32 = arith.constant 0 : i32
    %c0_i32_0 = arith.constant 0 : i32
    return %arg0, %c0_i32 : i32, i32
  }
  func.func @transform_1(%arg0: i32) -> (i32, i32) {
    %c0_i32 = arith.constant 0 : i32
    %c0_i32_0 = arith.constant 0 : i32
    %c0_i32_1 = arith.constant 0 : i32
    return %c0_i32, %c0_i32_0 : i32, i32
  }
  func.func @transform_2(%arg0: i32) -> (i32, i32) {
    %c0_i32 = arith.constant 0 : i32
    %c0_i32_0 = arith.constant 0 : i32
    %c0_i32_1 = arith.constant 0 : i32
    return %c0_i32, %c0_i32_0 : i32, i32
  }
  func.func @transform_3(%arg0: i32) -> (i32, i32) {
    %c0_i32 = arith.constant 0 : i32
    %c0_i32_0 = arith.constant 0 : i32
    %c0_i32_1 = arith.constant 0 : i32
    return %c0_i32, %c0_i32_0 : i32, i32
  }
  func.func @transform_4(%arg0: i32) -> (i32, i32) {
    %c0_i32 = arith.constant 0 : i32
    %c0_i32_0 = arith.constant 0 : i32
    %c0_i32_1 = arith.constant 0 : i32
    return %c0_i32, %c0_i32_0 : i32, i32
  }
  func.func @transform_5(%arg0: i32) -> (i32, i32) {
    %c0_i32 = arith.constant 0 : i32
    %c0_i32_0 = arith.constant 0 : i32
    return %arg0, %c0_i32 : i32, i32
  }
}

</mosaic_0001>

<llo_original>
// kernel: tile.13
$region0: #{tile.13}
  #allocation0 [shape = 's32[1]{0}', space=sflag, size = 0x4, scoped, tag = 'scoped memory for tile.13']
  %s0 = inlined_call_operand.vmem [shape: f32[32], index: 0, kind: input, shape index: {}]
  %s1 = inlined_call_operand.vmem [shape: f32[16,32], index: 1, kind: output, shape index: {}]
  // Predicated region
  $region2: #{tile.13} parent=0 // pred_check
    _
  $region3: #{tile.13} parent=0 // pred_check_branch
    %3 = sbr.rel (0) target = $region5
  $region4: #{tile.13} parent=0 // pred_region
    _
  $region5: #{tile.13} parent=0 // pred_fallthru
    _
  %v4 = vld [vmem:[%s0] ss:$0 sm:$0xff]
  %5 = vst [vmem:[%s1] sm:$0xff] %v4
  %s6 = scalar_lea.vmem %s1, 8
  %7 = vst [vmem:[%s6] sm:$0xff] %v4

// kernel: tile.14
$region0: #{tile.14}
  %s0 = inlined_call_operand.vmem [shape: f32[16,32], index: 0, kind: input, shape index: {}]
  %s1 = inlined_call_operand.vmem [shape: f32[1,512], index: 1, kind: output, shape index: {}]
  $region1: #{tile.14} parent=0
    #allocation0 [shape = 'u8[16384]{0}', space=vmem, size = 0x4000, scoped, tag = 'scoped mem for output reshape']
    %v2 = vld [vmem:[%s0] ss:$4 sm:$0xf]
    %vm3 = vcmask 261120
    %4 = vst.msk [vmem:[#allocation0] ss:$8 sm:$0xf] %vm3, %v2
    %s5 = scalar_lea.vmem %s0, 3
    %v6 = vld [vmem:[%s5] ss:$4 sm:$0xf]
    %7 = vrot.lane.b32.xlu0 %v6, 96
    %v8 = vpop.permute.xlu0 %7
    %vm9 = vcmask 1048320
    %10 = vst.msk [vmem:[#allocation0] ss:$8 sm:$0xf] %vm9, %v8
    %s11 = scalar_lea.vmem %s0, 2
    %v12 = vld [vmem:[%s11] ss:$4 sm:$0xf]
    %13 = vrot.lane.b32.xlu0 %v12, 64
    %v14 = vpop.permute.xlu0 %13
    %vm15 = vcmask 785920
    %16 = vst.msk [vmem:[#allocation0] ss:$8 sm:$0xf] %vm15, %v14
    %s17 = scalar_lea.vmem %s0, 1
    %v18 = vld [vmem:[%s17] ss:$4 sm:$0xf]
    %19 = vrot.lane.b32.xlu0 %v18, 32
    %v20 = vpop.permute.xlu0 %19
    %vm21 = vcmask 523520
    %22 = vst.msk [vmem:[#allocation0] ss:$8 sm:$0xf] %vm21, %v20
    %s24 = sshllo.u32 0, 1
    %v26 = vld [vmem:[#allocation0] sm:%s24]
    %s27 = sshllo.u32 0, 1
    %28 = vst [vmem:[%s1] sm:%s27] %v26
    %s29 = scalar_lea.vmem [#allocation0], 8
    %v30 = vld [vmem:[%s29] sm:%s24]
    %s31 = sshllo.u32 0, 1
    %s32 = scalar_lea.vmem %s1, 1
    %33 = vst [vmem:[%s32] sm:%s31] %v30
    %s34 = scalar_lea.vmem [#allocation0], 16
    %v35 = vld [vmem:[%s34] sm:%s24]
    %s36 = sshllo.u32 0, 1
    %s37 = smul.addr 1, 2
    %s38 = scalar_lea.vmem %s1, %s37
    %39 = vst [vmem:[%s38] sm:%s36] %v35
    %s40 = scalar_lea.vmem [#allocation0], 24
    %v41 = vld [vmem:[%s40] sm:%s24]
    %s42 = sshllo.u32 0, 1
    %s43 = smul.addr 1, 3
    %s44 = scalar_lea.vmem %s1, %s43
    %45 = vst [vmem:[%s44] sm:%s42] %v41

// kernel: tile.19
$region0: #{tile.19}
  %s0 = inlined_call_operand.vmem [shape: f32[16,8], index: 0, kind: input, shape index: {}]
  %s1 = inlined_call_operand.vmem [shape: f32[1,128], index: 1, kind: output, shape index: {}]
  $region1: #{tile.19} parent=0
    #allocation0 [shape = 'u8[4096]{0}', space=vmem, size = 0x1000, scoped, tag = 'scoped mem for output reshape']
    %v2 = vld [vmem:[%s0] sm:$0x1]
    %vm3 = vcmask 64512
    %4 = vst.msk [vmem:[#allocation0] sm:$0x1] %vm3, %v2
    %s5 = scalar_lea.vmem %s0, 15
    %v6 = vld [vmem:[%s5] sm:$0x1]
    %7 = vrot.lane.b32.xlu0 %v6, 120
    %v8 = vpop.permute.xlu0 %7
    %vm9 = vcmask 1048512
    %10 = vst.msk [vmem:[#allocation0] sm:$0x1] %vm9, %v8
    %s11 = scalar_lea.vmem %s0, 14
    %v12 = vld [vmem:[%s11] sm:$0x1]
    %13 = vrot.lane.b32.xlu0 %v12, 112
    %v14 = vpop.permute.xlu0 %13
    %vm15 = vcmask 982912
    %16 = vst.msk [vmem:[#allocation0] sm:$0x1] %vm15, %v14
    %s17 = scalar_lea.vmem %s0, 13
    %v18 = vld [vmem:[%s17] sm:$0x1]
    %19 = vrot.lane.b32.xlu0 %v18, 104
    %v20 = vpop.permute.xlu0 %19
    %vm21 = vcmask 917312
    %22 = vst.msk [vmem:[#allocation0] sm:$0x1] %vm21, %v20
    %s23 = scalar_lea.vmem %s0, 12
    %v24 = vld [vmem:[%s23] sm:$0x1]
    %25 = vrot.lane.b32.xlu0 %v24, 96
    %v26 = vpop.permute.xlu0 %25
    %vm27 = vcmask 851712
    %28 = vst.msk [vmem:[#allocation0] sm:$0x1] %vm27, %v26
    %s29 = scalar_lea.vmem %s0, 11
    %v30 = vld [vmem:[%s29] sm:$0x1]
    %31 = vrot.lane.b32.xlu0 %v30, 88
    %v32 = vpop.permute.xlu0 %31
    %vm33 = vcmask 786112
    %34 = vst.msk [vmem:[#allocation0] sm:$0x1] %vm33, %v32
    %s35 = scalar_lea.vmem %s0, 10
    %v36 = vld [vmem:[%s35] sm:$0x1]
    %37 = vrot.lane.b32.xlu0 %v36, 80
    %v38 = vpop.permute.xlu0 %37
    %vm39 = vcmask 720512
    %40 = vst.msk [vmem:[#allocation0] sm:$0x1] %vm39, %v38
    %s41 = scalar_lea.vmem %s0, 9
    %v42 = vld [vmem:[%s41] sm:$0x1]
    %43 = vrot.lane.b32.xlu0 %v42, 72
    %v44 = vpop.permute.xlu0 %43
    %vm45 = vcmask 654912
    %46 = vst.msk [vmem:[#allocation0] sm:$0x1] %vm45, %v44
    %s47 = scalar_lea.vmem %s0, 8
    %v48 = vld [vmem:[%s47] sm:$0x1]
    %49 = vrot.lane.b32.xlu0 %v48, 64
    %v50 = vpop.permute.xlu0 %49
    %vm51 = vcmask 589312
    %52 = vst.msk [vmem:[#allocation0] sm:$0x1] %vm51, %v50
    %s53 = scalar_lea.vmem %s0, 7
    %v54 = vld [vmem:[%s53] sm:$0x1]
    %55 = vrot.lane.b32.xlu0 %v54, 56
    %v56 = vpop.permute.xlu0 %55
    %vm57 = vcmask 523712
    %58 = vst.msk [vmem:[#allocation0] sm:$0x1] %vm57, %v56
    %s59 = scalar_lea.vmem %s0, 6
    %v60 = vld [vmem:[%s59] sm:$0x1]
    %61 = vrot.lane.b32.xlu0 %v60, 48
    %v62 = vpop.permute.xlu0 %61
    %vm63 = vcmask 458112
    %64 = vst.msk [vmem:[#allocation0] sm:$0x1] %vm63, %v62
    %s65 = scalar_lea.vmem %s0, 5
    %v66 = vld [vmem:[%s65] sm:$0x1]
    %67 = vrot.lane.b32.xlu0 %v66, 40
    %v68 = vpop.permute.xlu0 %67
    %vm69 = vcmask 392512
    %70 = vst.msk [vmem:[#allocation0] sm:$0x1] %vm69, %v68
    %s71 = scalar_lea.vmem %s0, 4
    %v72 = vld [vmem:[%s71] sm:$0x1]
    %73 = vrot.lane.b32.xlu0 %v72, 32
    %v74 = vpop.permute.xlu0 %73
    %vm75 = vcmask 326912
    %76 = vst.msk [vmem:[#allocation0] sm:$0x1] %vm75, %v74
    %s77 = scalar_lea.vmem %s0, 3
    %v78 = vld [vmem:[%s77] sm:$0x1]
    %79 = vrot.lane.b32.xlu0 %v78, 24
    %v80 = vpop.permute.xlu0 %79
    %vm81 = vcmask 261312
    %82 = vst.msk [vmem:[#allocation0] sm:$0x1] %vm81, %v80
    %s83 = scalar_lea.vmem %s0, 2
    %v84 = vld [vmem:[%s83] sm:$0x1]
    %85 = vrot.lane.b32.xlu0 %v84, 16
    %v86 = vpop.permute.xlu0 %85
    %vm87 = vcmask 195712
    %88 = vst.msk [vmem:[#allocation0] sm:$0x1] %vm87, %v86
    %s89 = scalar_lea.vmem %s0, 1
    %v90 = vld [vmem:[%s89] sm:$0x1]
    %91 = vrot.lane.b32.xlu0 %v90, 8
    %v92 = vpop.permute.xlu0 %91
    %vm93 = vcmask 130112
    %94 = vst.msk [vmem:[#allocation0] sm:$0x1] %vm93, %v92
    %s96 = sshllo.u32 0, 1
    %v98 = vld [vmem:[#allocation0] sm:%s96]
    %s99 = sshllo.u32 0, 1
    %100 = vst [vmem:[%s1] sm:%s99] %v98

// kernel: tile.18
$region0: #{tile.18}
  #allocation0 [shape = 's32[1]{0}', space=sflag, size = 0x4, scoped, tag = 'scoped memory for tile.18']
  %s0 = inlined_call_operand.vmem [shape: f32[8], index: 0, kind: input, shape index: {}]
  %s1 = inlined_call_operand.vmem [shape: f32[16,8], index: 1, kind: output, shape index: {}]
  // Predicated region
  $region2: #{tile.18} parent=0 // pred_check
    _
  $region3: #{tile.18} parent=0 // pred_check_branch
    %3 = sbr.rel (0) target = $region5
  $region4: #{tile.18} parent=0 // pred_region
    _
  $region5: #{tile.18} parent=0 // pred_fallthru
    _
  %v4 = vld [vmem:[%s0] ss:$0 sm:$0xff]
  %5 = vst [vmem:[%s1] sm:$0xff] %v4
  %s6 = scalar_lea.vmem %s1, 8
  %7 = vst [vmem:[%s6] sm:$0xff] %v4

// kernel: tabular_model.1
$region0: #{tabular_model.1}
  #allocation0 [shape = 'u32[]', space=smem, size = 0x4, offset = 0x4, fixed_abs, tag = 'smem constant byte address 0x4 - core index']
  #allocation1 [shape = 'u32[144,128]{1,0:T(1,128)}', space=vmem, size = 0x12000, scoped, tag = 'internal scratch']
  %s0 = inlined_call_operand.vmem [shape: f32[2,256], index: 0, kind: input, shape index: {}]
  %s1 = inlined_call_operand.vmem [shape: bf16[256,512], index: 1, kind: input, shape index: {}]
  %s2 = inlined_call_operand.vmem [shape: f32[1,512], index: 2, kind: input, shape index: {}]
  %s3 = inlined_call_operand.vmem [shape: bf16[512,128], index: 3, kind: input, shape index: {}]
  %s4 = inlined_call_operand.vmem [shape: f32[1,128], index: 4, kind: input, shape index: {}]
  %s5 = inlined_call_operand.vmem [shape: f32[2,128], index: 5, kind: output, shape index: {}]
  %s6 = sld [smem:[#allocation0]]
  $region30: #{tabular_model.1} parent=0
    _
  %s8 = ssub.s32 1, %s6
  %s9 = scalar_select 0, %s8, %s6
  // Predicated region
  $region2: #{tabular_model.1} parent=0 // pred_check
    _
  $region3: #{tabular_model.1} parent=0 // pred_check_branch
    %11 = sbr.rel (0) target = $region5
  $region4: #{tabular_model.1} parent=0 // pred_region
    _
  $region5: #{tabular_model.1} parent=0 // pred_fallthru
    _
  // Predicated region
  $region6: #{tabular_model.1} parent=0 // pred_check
    _
  $region7: #{tabular_model.1} parent=0 // pred_check_branch
    %13 = sbr.rel (0) target = $region9
  $region8: #{tabular_model.1} parent=0 // pred_region
    _
  $region9: #{tabular_model.1} parent=0 // pred_fallthru
    _
  // Predicated region
  $region10: #{tabular_model.1} parent=0 // pred_check
    _
  $region11: #{tabular_model.1} parent=0 // pred_check_branch
    %15 = sbr.rel (0) target = $region13
  $region12: #{tabular_model.1} parent=0 // pred_region
    _
  $region13: #{tabular_model.1} parent=0 // pred_fallthru
    _
  // Predicated region
  $region14: #{tabular_model.1} parent=0 // pred_check
    _
  $region15: #{tabular_model.1} parent=0 // pred_check_branch
    %17 = sbr.rel (0) target = $region17
  $region16: #{tabular_model.1} parent=0 // pred_region
    _
  $region17: #{tabular_model.1} parent=0 // pred_fallthru
    _
  // Predicated region
  $region18: #{tabular_model.1} parent=0 // pred_check
    _
  $region19: #{tabular_model.1} parent=0 // pred_check_branch
    %19 = sbr.rel (0) target = $region21
  $region20: #{tabular_model.1} parent=0 // pred_region
    _
  $region21: #{tabular_model.1} parent=0 // pred_fallthru
    _
  %v21 = vld [vmem:[%s0] sm:$0xf]
  %v24 = vunpack.c.l.s4 1983009808
  %v25 = vunpack.c.0.s8 %v24
  %v26 = vlaneseq
  %v27 = vshrl.u32 %v26, 7
  %v28 = vsub.s32 %v25, %v27
  %v29 = vrot.slane %v21, %v28
  %v30 = vcombine.high %v29, %v29
  %v33 = vpack.c.bf16 %v29, %v29
  %v34 = vpack.c.bf16 %v30, %v30
  %v35 = vld [vmem:[%s1] sm:$0xff]
  %v36 = vld [vmem:[%s1 + $0x8] sm:$0xff]
  %v37 = vld [vmem:[%s1 + $0x10] sm:$0xff]
  %v38 = vld [vmem:[%s1 + $0x18] sm:$0xff]
  %v39 = vld [vmem:[%s1 + $0x20] sm:$0xff]
  %v40 = vld [vmem:[%s1 + $0x28] sm:$0xff]
  %v41 = vld [vmem:[%s1 + $0x30] sm:$0xff]
  %v42 = vld [vmem:[%s1 + $0x38] sm:$0xff]
  %v43 = vld [vmem:[%s1 + $0x40] sm:$0xff]
  %v44 = vld [vmem:[%s1 + $0x48] sm:$0xff]
  %v45 = vld [vmem:[%s1 + $0x50] sm:$0xff]
  %v46 = vld [vmem:[%s1 + $0x58] sm:$0xff]
  %v47 = vld [vmem:[%s1 + $0x60] sm:$0xff]
  %v48 = vld [vmem:[%s1 + $0x68] sm:$0xff]
  %v49 = vld [vmem:[%s1 + $0x70] sm:$0xff]
  %v50 = vld [vmem:[%s1 + $0x78] sm:$0xff]
  %v51 = vld [vmem:[%s1 + $0x80] sm:$0xff]
  %v52 = vld [vmem:[%s1 + $0x88] sm:$0xff]
  %v53 = vld [vmem:[%s1 + $0x90] sm:$0xff]
  %v54 = vld [vmem:[%s1 + $0x98] sm:$0xff]
  %v55 = vld [vmem:[%s1 + $0xa0] sm:$0xff]
  %v56 = vld [vmem:[%s1 + $0xa8] sm:$0xff]
  %v57 = vld [vmem:[%s1 + $0xb0] sm:$0xff]
  %v58 = vld [vmem:[%s1 + $0xb8] sm:$0xff]
  %v59 = vld [vmem:[%s1 + $0xc0] sm:$0xff]
  %v60 = vld [vmem:[%s1 + $0xc8] sm:$0xff]
  %v61 = vld [vmem:[%s1 + $0xd0] sm:$0xff]
  %v62 = vld [vmem:[%s1 + $0xd8] sm:$0xff]
  %v63 = vld [vmem:[%s1 + $0xe0] sm:$0xff]
  %v64 = vld [vmem:[%s1 + $0xe8] sm:$0xff]
  %v65 = vld [vmem:[%s1 + $0xf0] sm:$0xff]
  %v66 = vld [vmem:[%s1 + $0xf8] sm:$0xff]
  %v67 = vld [vmem:[%s1 + $0x100] sm:$0xff]
  %v68 = vld [vmem:[%s1 + $0x108] sm:$0xff]
  %v69 = vld [vmem:[%s1 + $0x110] sm:$0xff]
  %v70 = vld [vmem:[%s1 + $0x118] sm:$0xff]
  %v71 = vld [vmem:[%s1 + $0x120] sm:$0xff]
  %v72 = vld [vmem:[%s1 + $0x128] sm:$0xff]
  %v73 = vld [vmem:[%s1 + $0x130] sm:$0xff]
  %v74 = vld [vmem:[%s1 + $0x138] sm:$0xff]
  %v75 = vld [vmem:[%s1 + $0x140] sm:$0xff]
  %v76 = vld [vmem:[%s1 + $0x148] sm:$0xff]
  %v77 = vld [vmem:[%s1 + $0x150] sm:$0xff]
  %v78 = vld [vmem:[%s1 + $0x158] sm:$0xff]
  %v79 = vld [vmem:[%s1 + $0x160] sm:$0xff]
  %v80 = vld [vmem:[%s1 + $0x168] sm:$0xff]
  %v81 = vld [vmem:[%s1 + $0x170] sm:$0xff]
  %v82 = vld [vmem:[%s1 + $0x178] sm:$0xff]
  %v83 = vld [vmem:[%s1 + $0x180] sm:$0xff]
  %v84 = vld [vmem:[%s1 + $0x188] sm:$0xff]
  %v85 = vld [vmem:[%s1 + $0x190] sm:$0xff]
  %v86 = vld [vmem:[%s1 + $0x198] sm:$0xff]
  %v87 = vld [vmem:[%s1 + $0x1a0] sm:$0xff]
  %v88 = vld [vmem:[%s1 + $0x1a8] sm:$0xff]
  %v89 = vld [vmem:[%s1 + $0x1b0] sm:$0xff]
  %v90 = vld [vmem:[%s1 + $0x1b8] sm:$0xff]
  %v91 = vld [vmem:[%s1 + $0x1c0] sm:$0xff]
  %v92 = vld [vmem:[%s1 + $0x1c8] sm:$0xff]
  %v93 = vld [vmem:[%s1 + $0x1d0] sm:$0xff]
  %v94 = vld [vmem:[%s1 + $0x1d8] sm:$0xff]
  %v95 = vld [vmem:[%s1 + $0x1e0] sm:$0xff]
  %v96 = vld [vmem:[%s1 + $0x1e8] sm:$0xff]
  %v97 = vld [vmem:[%s1 + $0x1f0] sm:$0xff]
  %v98 = vld [vmem:[%s1 + $0x1f8] sm:$0xff]
  %v99 = vld [vmem:[%s2] sm:$0xf]
  %v101 = vlaneseq
  %v102 = vshrl.u32 %v101, 7
  %v103 = vsub.s32 0, %v102
  %v104 = vrot.slane %v99, %v103
  %v105 = vlaneseq
  %v106 = vshrl.u32 %v105, 7
  %v107 = vsub.s32 1, %v106
  %v108 = vrot.slane %v99, %v107
  %v109 = vlaneseq
  %v110 = vshrl.u32 %v109, 7
  %v111 = vsub.s32 2, %v110
  %v112 = vrot.slane %v99, %v111
  %v113 = vlaneseq
  %v114 = vshrl.u32 %v113, 7
  %v115 = vsub.s32 3, %v114
  %v116 = vrot.slane %v99, %v115
  %v185 = vunpack.c.l.b16 %v35
  %v186 = vunpack.c.h.b16 %v35
  %v187 = vunpack.c.l.b16 %v36
  %v188 = vunpack.c.h.b16 %v36
  %v189 = vunpack.c.l.b16 %v37
  %v190 = vunpack.c.h.b16 %v37
  %v191 = vunpack.c.l.b16 %v38
  %v192 = vunpack.c.h.b16 %v38
  %v193 = vunpack.c.l.b16 %v39
  %v194 = vunpack.c.h.b16 %v39
  %v195 = vunpack.c.l.b16 %v40
  %v196 = vunpack.c.h.b16 %v40
  %v197 = vunpack.c.l.b16 %v41
  %v198 = vunpack.c.h.b16 %v41
  %v199 = vunpack.c.l.b16 %v42
  %v200 = vunpack.c.h.b16 %v42
  %v201 = vunpack.c.l.b16 %v43
  %v202 = vunpack.c.h.b16 %v43
  %v203 = vunpack.c.l.b16 %v44
  %v204 = vunpack.c.h.b16 %v44
  %v205 = vunpack.c.l.b16 %v45
  %v206 = vunpack.c.h.b16 %v45
  %v207 = vunpack.c.l.b16 %v46
  %v208 = vunpack.c.h.b16 %v46
  %v209 = vunpack.c.l.b16 %v47
  %v210 = vunpack.c.h.b16 %v47
  %v211 = vunpack.c.l.b16 %v48
  %v212 = vunpack.c.h.b16 %v48
  %v213 = vunpack.c.l.b16 %v49
  %v214 = vunpack.c.h.b16 %v49
  %v215 = vunpack.c.l.b16 %v50
  %v216 = vunpack.c.h.b16 %v50
  %v217 = vunpack.c.l.b16 %v51
  %v218 = vunpack.c.h.b16 %v51
  %v219 = vunpack.c.l.b16 %v52
  %v220 = vunpack.c.h.b16 %v52
  %v221 = vunpack.c.l.b16 %v53
  %v222 = vunpack.c.h.b16 %v53
  %v223 = vunpack.c.l.b16 %v54
  %v224 = vunpack.c.h.b16 %v54
  %v225 = vunpack.c.l.b16 %v55
  %v226 = vunpack.c.h.b16 %v55
  %v227 = vunpack.c.l.b16 %v56
  %v228 = vunpack.c.h.b16 %v56
  %v229 = vunpack.c.l.b16 %v57
  %v230 = vunpack.c.h.b16 %v57
  %v231 = vunpack.c.l.b16 %v58
  %v232 = vunpack.c.h.b16 %v58
  %v233 = vunpack.c.l.b16 %v59
  %v234 = vunpack.c.h.b16 %v59
  %v235 = vunpack.c.l.b16 %v60
  %v236 = vunpack.c.h.b16 %v60
  %v237 = vunpack.c.l.b16 %v61
  %v238 = vunpack.c.h.b16 %v61
  %v239 = vunpack.c.l.b16 %v62
  %v240 = vunpack.c.h.b16 %v62
  %v241 = vunpack.c.l.b16 %v63
  %v242 = vunpack.c.h.b16 %v63
  %v243 = vunpack.c.l.b16 %v64
  %v244 = vunpack.c.h.b16 %v64
  %v245 = vunpack.c.l.b16 %v65
  %v246 = vunpack.c.h.b16 %v65
  %v247 = vunpack.c.l.b16 %v66
  %v248 = vunpack.c.h.b16 %v66
  %v249 = vunpack.c.l.b16 %v67
  %v250 = vunpack.c.h.b16 %v67
  %v251 = vunpack.c.l.b16 %v68
  %v252 = vunpack.c.h.b16 %v68
  %v253 = vunpack.c.l.b16 %v69
  %v254 = vunpack.c.h.b16 %v69
  %v255 = vunpack.c.l.b16 %v70
  %v256 = vunpack.c.h.b16 %v70
  %v257 = vunpack.c.l.b16 %v71
  %v258 = vunpack.c.h.b16 %v71
  %v259 = vunpack.c.l.b16 %v72
  %v260 = vunpack.c.h.b16 %v72
  %v261 = vunpack.c.l.b16 %v73
  %v262 = vunpack.c.h.b16 %v73
  %v263 = vunpack.c.l.b16 %v74
  %v264 = vunpack.c.h.b16 %v74
  %v265 = vunpack.c.l.b16 %v75
  %v266 = vunpack.c.h.b16 %v75
  %v267 = vunpack.c.l.b16 %v76
  %v268 = vunpack.c.h.b16 %v76
  %v269 = vunpack.c.l.b16 %v77
  %v270 = vunpack.c.h.b16 %v77
  %v271 = vunpack.c.l.b16 %v78
  %v272 = vunpack.c.h.b16 %v78
  %v273 = vunpack.c.l.b16 %v79
  %v274 = vunpack.c.h.b16 %v79
  %v275 = vunpack.c.l.b16 %v80
  %v276 = vunpack.c.h.b16 %v80
  %v277 = vunpack.c.l.b16 %v81
  %v278 = vunpack.c.h.b16 %v81
  %v279 = vunpack.c.l.b16 %v82
  %v280 = vunpack.c.h.b16 %v82
  %v281 = vunpack.c.l.b16 %v83
  %v282 = vunpack.c.h.b16 %v83
  %v283 = vunpack.c.l.b16 %v84
  %v284 = vunpack.c.h.b16 %v84
  %v285 = vunpack.c.l.b16 %v85
  %v286 = vunpack.c.h.b16 %v85
  %v287 = vunpack.c.l.b16 %v86
  %v288 = vunpack.c.h.b16 %v86
  %v289 = vunpack.c.l.b16 %v87
  %v290 = vunpack.c.h.b16 %v87
  %v291 = vunpack.c.l.b16 %v88
  %v292 = vunpack.c.h.b16 %v88
  %v293 = vunpack.c.l.b16 %v89
  %v294 = vunpack.c.h.b16 %v89
  %v295 = vunpack.c.l.b16 %v90
  %v296 = vunpack.c.h.b16 %v90
  %v297 = vunpack.c.l.b16 %v91
  %v298 = vunpack.c.h.b16 %v91
  %v299 = vunpack.c.l.b16 %v92
  %v300 = vunpack.c.h.b16 %v92
  %v301 = vunpack.c.l.b16 %v93
  %v302 = vunpack.c.h.b16 %v93
  %v303 = vunpack.c.l.b16 %v94
  %v304 = vunpack.c.h.b16 %v94
  %v305 = vunpack.c.l.b16 %v95
  %v306 = vunpack.c.h.b16 %v95
  %v307 = vunpack.c.l.b16 %v96
  %v308 = vunpack.c.h.b16 %v96
  %v309 = vunpack.c.l.b16 %v97
  %v310 = vunpack.c.h.b16 %v97
  %v311 = vunpack.c.l.b16 %v98
  %v312 = vunpack.c.h.b16 %v98
  %v313 = vpack.c.b16 %v189, %v185
  %v314 = vpack.c.b16 %v190, %v186
  %v315 = vpack.c.b16 %v191, %v187
  %v316 = vpack.c.b16 %v192, %v188
  %v317 = vpack.c.b16 %v197, %v193
  %v318 = vpack.c.b16 %v198, %v194
  %v319 = vpack.c.b16 %v199, %v195
  %v320 = vpack.c.b16 %v200, %v196
  %v321 = vpack.c.b16 %v205, %v201
  %v322 = vpack.c.b16 %v206, %v202
  %v323 = vpack.c.b16 %v207, %v203
  %v324 = vpack.c.b16 %v208, %v204
  %v325 = vpack.c.b16 %v213, %v209
  %v326 = vpack.c.b16 %v214, %v210
  %v327 = vpack.c.b16 %v215, %v211
  %v328 = vpack.c.b16 %v216, %v212
  %v329 = vpack.c.b16 %v221, %v217
  %v330 = vpack.c.b16 %v222, %v218
  %v331 = vpack.c.b16 %v223, %v219
  %v332 = vpack.c.b16 %v224, %v220
  %v333 = vpack.c.b16 %v229, %v225
  %v334 = vpack.c.b16 %v230, %v226
  %v335 = vpack.c.b16 %v231, %v227
  %v336 = vpack.c.b16 %v232, %v228
  %v337 = vpack.c.b16 %v237, %v233
  %v338 = vpack.c.b16 %v238, %v234
  %v339 = vpack.c.b16 %v239, %v235
  %v340 = vpack.c.b16 %v240, %v236
  %v341 = vpack.c.b16 %v245, %v241
  %v342 = vpack.c.b16 %v246, %v242
  %v343 = vpack.c.b16 %v247, %v243
  %v344 = vpack.c.b16 %v248, %v244
  %v345 = vpack.c.b16 %v253, %v249
  %v346 = vpack.c.b16 %v254, %v250
  %v347 = vpack.c.b16 %v255, %v251
  %v348 = vpack.c.b16 %v256, %v252
  %v349 = vpack.c.b16 %v261, %v257
  %v350 = vpack.c.b16 %v262, %v258
  %v351 = vpack.c.b16 %v263, %v259
  %v352 = vpack.c.b16 %v264, %v260
  %v353 = vpack.c.b16 %v269, %v265
  %v354 = vpack.c.b16 %v270, %v266
  %v355 = vpack.c.b16 %v271, %v267
  %v356 = vpack.c.b16 %v272, %v268
  %v357 = vpack.c.b16 %v277, %v273
  %v358 = vpack.c.b16 %v278, %v274
  %v359 = vpack.c.b16 %v279, %v275
  %v360 = vpack.c.b16 %v280, %v276
  %v361 = vpack.c.b16 %v285, %v281
  %v362 = vpack.c.b16 %v286, %v282
  %v363 = vpack.c.b16 %v287, %v283
  %v364 = vpack.c.b16 %v288, %v284
  %v365 = vpack.c.b16 %v293, %v289
  %v366 = vpack.c.b16 %v294, %v290
  %v367 = vpack.c.b16 %v295, %v291
  %v368 = vpack.c.b16 %v296, %v292
  %v369 = vpack.c.b16 %v301, %v297
  %v370 = vpack.c.b16 %v302, %v298
  %v371 = vpack.c.b16 %v303, %v299
  %v372 = vpack.c.b16 %v304, %v300
  %v373 = vpack.c.b16 %v309, %v305
  %v374 = vpack.c.b16 %v310, %v306
  %v375 = vpack.c.b16 %v311, %v307
  %v376 = vpack.c.b16 %v312, %v308
  %441 = vmatprep.subr.bf16.mxu0 %v314
  %442 = vmatpush1.bf16.msra.mxu0 %v313
  %443 = vmatprep.subr.bf16.mxu0 %v318
  %444 = vmatpush1.bf16.msra.mxu0 %v317
  %445 = vmatprep.subr.bf16.mxu0 %v322
  %446 = vmatpush1.bf16.msra.mxu0 %v321
  %447 = vmatprep.subr.bf16.mxu0 %v326
  %448 = vmatpush1.bf16.msra.mxu0 %v325
  %449 = vmatprep.subr.bf16.mxu0 %v330
  %450 = vmatpush1.bf16.msra.mxu0 %v329
  %451 = vmatprep.subr.bf16.mxu0 %v334
  %452 = vmatpush1.bf16.msra.mxu0 %v333
  %453 = vmatprep.subr.bf16.mxu0 %v338
  %454 = vmatpush1.bf16.msra.mxu0 %v337
  %455 = vmatprep.subr.bf16.mxu0 %v342
  %456 = vmatpush1.bf16.msra.mxu0 %v341
  %457 = vmatprep.subr.bf16.mxu0 %v346
  %458 = vmatpush1.bf16.msra.mxu0 %v345
  %459 = vmatprep.subr.bf16.mxu0 %v350
  %460 = vmatpush1.bf16.msra.mxu0 %v349
  %461 = vmatprep.subr.bf16.mxu0 %v354
  %462 = vmatpush1.bf16.msra.mxu0 %v353
  %463 = vmatprep.subr.bf16.mxu0 %v358
  %464 = vmatpush1.bf16.msra.mxu0 %v357
  %465 = vmatprep.subr.bf16.mxu0 %v362
  %466 = vmatpush1.bf16.msra.mxu0 %v361
  %467 = vmatprep.subr.bf16.mxu0 %v366
  %468 = vmatpush1.bf16.msra.mxu0 %v365
  %469 = vmatprep.subr.bf16.mxu0 %v370
  %470 = vmatpush1.bf16.msra.mxu0 %v369
  %471 = vmatprep.subr.bf16.mxu0 %v374
  %472 = vmatpush1.bf16.msra.mxu0 %v373
  %473 = vmatprep.mubr.bf16.mxu0 %v34
  %474 = vmatmul.mubr.bf16.gmra.mrb[0].mxu0 %v33
  %v475 = vpop.f32.mrb[0].mxu0
  %v476 = vadd.f32 %v104, %v475
  %v477 = vpop.f32.mrb[0].mxu0
  %v478 = vadd.f32 %v108, %v477
  %v479 = vpop.f32.mrb[0].mxu0
  %v480 = vpop.f32.mrb[0].mxu0
  %481 = vdwg.mxu0
  %482 = vmatprep.subr.bf16.mxu0 %v316
  %483 = vmatpush1.bf16.msra.mxu0 %v315
  %484 = vmatprep.subr.bf16.mxu0 %v320
  %485 = vmatpush1.bf16.msra.mxu0 %v319
  %486 = vmatprep.subr.bf16.mxu0 %v324
  %487 = vmatpush1.bf16.msra.mxu0 %v323
  %488 = vmatprep.subr.bf16.mxu0 %v328
  %489 = vmatpush1.bf16.msra.mxu0 %v327
  %490 = vmatprep.subr.bf16.mxu0 %v332
  %491 = vmatpush1.bf16.msra.mxu0 %v331
  %492 = vmatprep.subr.bf16.mxu0 %v336
  %493 = vmatpush1.bf16.msra.mxu0 %v335
  %494 = vmatprep.subr.bf16.mxu0 %v340
  %495 = vmatpush1.bf16.msra.mxu0 %v339
  %496 = vmatprep.subr.bf16.mxu0 %v344
  %497 = vmatpush1.bf16.msra.mxu0 %v343
  %498 = vmatprep.subr.bf16.mxu0 %v348
  %499 = vmatpush1.bf16.msra.mxu0 %v347
  %500 = vmatprep.subr.bf16.mxu0 %v352
  %501 = vmatpush1.bf16.msra.mxu0 %v351
  %502 = vmatprep.subr.bf16.mxu0 %v356
  %503 = vmatpush1.bf16.msra.mxu0 %v355
  %504 = vmatprep.subr.bf16.mxu0 %v360
  %505 = vmatpush1.bf16.msra.mxu0 %v359
  %506 = vmatprep.subr.bf16.mxu0 %v364
  %507 = vmatpush1.bf16.msra.mxu0 %v363
  %508 = vmatprep.subr.bf16.mxu0 %v368
  %509 = vmatpush1.bf16.msra.mxu0 %v367
  %510 = vmatprep.subr.bf16.mxu0 %v372
  %511 = vmatpush1.bf16.msra.mxu0 %v371
  %512 = vmatprep.subr.bf16.mxu0 %v376
  %513 = vmatpush1.bf16.msra.mxu0 %v375
  %514 = vmatprep.mubr.bf16.mxu0 %v34
  %515 = vmatmul.mubr.bf16.gmra.mrb[0].mxu0 %v33
  %v516 = vpop.f32.mrb[0].mxu0
  %v517 = vadd.f32 %v112, %v516
  %v518 = vpop.f32.mrb[0].mxu0
  %v519 = vadd.f32 %v116, %v518
  %v520 = vpop.f32.mrb[0].mxu0
  %v521 = vpop.f32.mrb[0].mxu0
  %522 = vdwg.mxu0
  %v523 = vmax.f32 %v476, 0.0
  %v524 = vmax.f32 %v478, 0.0
  %v525 = vmax.f32 %v517, 0.0
  %v526 = vmax.f32 %v519, 0.0
  %v527 = vpack.c.bf16 %v523, %v523
  %v528 = vpack.c.bf16 %v524, %v524
  %v529 = vpack.c.bf16 %v525, %v525
  %v530 = vpack.c.bf16 %v526, %v526
  %v531 = vld [vmem:[%s3] sm:$0xf]
  %v532 = vld [vmem:[%s3 + $0x4] sm:$0xf]
  %v533 = vld [vmem:[%s3 + $0x8] sm:$0xf]
  %v534 = vld [vmem:[%s3 + $0xc] sm:$0xf]
  %v535 = vld [vmem:[%s3 + $0x10] sm:$0xf]
  %v536 = vld [vmem:[%s3 + $0x14] sm:$0xf]
  %v537 = vld [vmem:[%s3 + $0x18] sm:$0xf]
  %v538 = vld [vmem:[%s3 + $0x1c] sm:$0xf]
  %v539 = vld [vmem:[%s3 + $0x20] sm:$0xf]
  %v540 = vld [vmem:[%s3 + $0x24] sm:$0xf]
  %v541 = vld [vmem:[%s3 + $0x28] sm:$0xf]
  %v542 = vld [vmem:[%s3 + $0x2c] sm:$0xf]
  %v543 = vld [vmem:[%s3 + $0x30] sm:$0xf]
  %v544 = vld [vmem:[%s3 + $0x34] sm:$0xf]
  %v545 = vld [vmem:[%s3 + $0x38] sm:$0xf]
  %v546 = vld [vmem:[%s3 + $0x3c] sm:$0xf]
  %v547 = vld [vmem:[%s3 + $0x40] sm:$0xf]
  %v548 = vld [vmem:[%s3 + $0x44] sm:$0xf]
  %v549 = vld [vmem:[%s3 + $0x48] sm:$0xf]
  %v550 = vld [vmem:[%s3 + $0x4c] sm:$0xf]
  %v551 = vld [vmem:[%s3 + $0x50] sm:$0xf]
  %v552 = vld [vmem:[%s3 + $0x54] sm:$0xf]
  %v553 = vld [vmem:[%s3 + $0x58] sm:$0xf]
  %v554 = vld [vmem:[%s3 + $0x5c] sm:$0xf]
  %v555 = vld [vmem:[%s3 + $0x60] sm:$0xf]
  %v556 = vld [vmem:[%s3 + $0x64] sm:$0xf]
  %v557 = vld [vmem:[%s3 + $0x68] sm:$0xf]
  %v558 = vld [vmem:[%s3 + $0x6c] sm:$0xf]
  %v559 = vld [vmem:[%s3 + $0x70] sm:$0xf]
  %v560 = vld [vmem:[%s3 + $0x74] sm:$0xf]
  %v561 = vld [vmem:[%s3 + $0x78] sm:$0xf]
  %v562 = vld [vmem:[%s3 + $0x7c] sm:$0xf]
  %v563 = vld [vmem:[%s3 + $0x80] sm:$0xf]
  %v564 = vld [vmem:[%s3 + $0x84] sm:$0xf]
  %v565 = vld [vmem:[%s3 + $0x88] sm:$0xf]
  %v566 = vld [vmem:[%s3 + $0x8c] sm:$0xf]
  %v567 = vld [vmem:[%s3 + $0x90] sm:$0xf]
  %v568 = vld [vmem:[%s3 + $0x94] sm:$0xf]
  %v569 = vld [vmem:[%s3 + $0x98] sm:$0xf]
  %v570 = vld [vmem:[%s3 + $0x9c] sm:$0xf]
  %v571 = vld [vmem:[%s3 + $0xa0] sm:$0xf]
  %v572 = vld [vmem:[%s3 + $0xa4] sm:$0xf]
  %v573 = vld [vmem:[%s3 + $0xa8] sm:$0xf]
  %v574 = vld [vmem:[%s3 + $0xac] sm:$0xf]
  %v575 = vld [vmem:[%s3 + $0xb0] sm:$0xf]
  %v576 = vld [vmem:[%s3 + $0xb4] sm:$0xf]
  %v577 = vld [vmem:[%s3 + $0xb8] sm:$0xf]
  %v578 = vld [vmem:[%s3 + $0xbc] sm:$0xf]
  %v579 = vld [vmem:[%s3 + $0xc0] sm:$0xf]
  %v580 = vld [vmem:[%s3 + $0xc4] sm:$0xf]
  %v581 = vld [vmem:[%s3 + $0xc8] sm:$0xf]
  %v582 = vld [vmem:[%s3 + $0xcc] sm:$0xf]
  %v583 = vld [vmem:[%s3 + $0xd0] sm:$0xf]
  %v584 = vld [vmem:[%s3 + $0xd4] sm:$0xf]
  %v585 = vld [vmem:[%s3 + $0xd8] sm:$0xf]
  %v586 = vld [vmem:[%s3 + $0xdc] sm:$0xf]
  %v587 = vld [vmem:[%s3 + $0xe0] sm:$0xf]
  %v588 = vld [vmem:[%s3 + $0xe4] sm:$0xf]
  %v589 = vld [vmem:[%s3 + $0xe8] sm:$0xf]
  %v590 = vld [vmem:[%s3 + $0xec] sm:$0xf]
  %v591 = vld [vmem:[%s3 + $0xf0] sm:$0xf]
  %v592 = vld [vmem:[%s3 + $0xf4] sm:$0xf]
  %v593 = vld [vmem:[%s3 + $0xf8] sm:$0xf]
  %v594 = vld [vmem:[%s3 + $0xfc] sm:$0xf]
  %v595 = vld [vmem:[%s4] sm:$0x1]
  %v597 = vlaneseq
  %v598 = vshrl.u32 %v597, 7
  %v599 = vsub.s32 0, %v598
  %v600 = vrot.slane %v595, %v599
  %v666 = vunpack.c.l.b16 %v531
  %v667 = vunpack.c.l.b16 %v532
  %v668 = vunpack.c.l.b16 %v533
  %v669 = vunpack.c.l.b16 %v534
  %v670 = vunpack.c.l.b16 %v535
  %v671 = vunpack.c.l.b16 %v536
  %v672 = vunpack.c.l.b16 %v537
  %v673 = vunpack.c.l.b16 %v538
  %v674 = vunpack.c.l.b16 %v539
  %v675 = vunpack.c.l.b16 %v540
  %v676 = vunpack.c.l.b16 %v541
  %v677 = vunpack.c.l.b16 %v542
  %v678 = vunpack.c.l.b16 %v543
  %v679 = vunpack.c.l.b16 %v544
  %v680 = vunpack.c.l.b16 %v545
  %v681 = vunpack.c.l.b16 %v546
  %v682 = vunpack.c.l.b16 %v547
  %v683 = vunpack.c.l.b16 %v548
  %v684 = vunpack.c.l.b16 %v549
  %v685 = vunpack.c.l.b16 %v550
  %v686 = vunpack.c.l.b16 %v551
  %v687 = vunpack.c.l.b16 %v552
  %v688 = vunpack.c.l.b16 %v553
  %v689 = vunpack.c.l.b16 %v554
  %v690 = vunpack.c.l.b16 %v555
  %v691 = vunpack.c.l.b16 %v556
  %v692 = vunpack.c.l.b16 %v557
  %v693 = vunpack.c.l.b16 %v558
  %v694 = vunpack.c.l.b16 %v559
  %v695 = vunpack.c.l.b16 %v560
  %v696 = vunpack.c.l.b16 %v561
  %v697 = vunpack.c.l.b16 %v562
  %v698 = vunpack.c.l.b16 %v563
  %v699 = vunpack.c.l.b16 %v564
  %v700 = vunpack.c.l.b16 %v565
  %v701 = vunpack.c.l.b16 %v566
  %v702 = vunpack.c.l.b16 %v567
  %v703 = vunpack.c.l.b16 %v568
  %v704 = vunpack.c.l.b16 %v569
  %v705 = vunpack.c.l.b16 %v570
  %v706 = vunpack.c.l.b16 %v571
  %v707 = vunpack.c.l.b16 %v572
  %v708 = vunpack.c.l.b16 %v573
  %v709 = vunpack.c.l.b16 %v574
  %v710 = vunpack.c.l.b16 %v575
  %v711 = vunpack.c.l.b16 %v576
  %v712 = vunpack.c.l.b16 %v577
  %v713 = vunpack.c.l.b16 %v578
  %v714 = vunpack.c.l.b16 %v579
  %v715 = vunpack.c.l.b16 %v580
  %v716 = vunpack.c.l.b16 %v581
  %v717 = vunpack.c.l.b16 %v582
  %v718 = vunpack.c.l.b16 %v583
  %v719 = vunpack.c.l.b16 %v584
  %v720 = vunpack.c.l.b16 %v585
  %v721 = vunpack.c.l.b16 %v586
  %v722 = vunpack.c.l.b16 %v587
  %v723 = vunpack.c.l.b16 %v588
  %v724 = vunpack.c.l.b16 %v589
  %v725 = vunpack.c.l.b16 %v590
  %v726 = vunpack.c.l.b16 %v591
  %v727 = vunpack.c.l.b16 %v592
  %v728 = vunpack.c.l.b16 %v593
  %v729 = vunpack.c.l.b16 %v594
  %v730 = vpack.c.b16 %v667, %v666
  %v731 = vpack.c.b16 %v669, %v668
  %v732 = vpack.c.b16 %v671, %v670
  %v733 = vpack.c.b16 %v673, %v672
  %v734 = vpack.c.b16 %v675, %v674
  %v735 = vpack.c.b16 %v677, %v676
  %v736 = vpack.c.b16 %v679, %v678
  %v737 = vpack.c.b16 %v681, %v680
  %v738 = vpack.c.b16 %v683, %v682
  %v739 = vpack.c.b16 %v685, %v684
  %v740 = vpack.c.b16 %v687, %v686
  %v741 = vpack.c.b16 %v689, %v688
  %v742 = vpack.c.b16 %v691, %v690
  %v743 = vpack.c.b16 %v693, %v692
  %v744 = vpack.c.b16 %v695, %v694
  %v745 = vpack.c.b16 %v697, %v696
  %v746 = vpack.c.b16 %v699, %v698
  %v747 = vpack.c.b16 %v701, %v700
  %v748 = vpack.c.b16 %v703, %v702
  %v749 = vpack.c.b16 %v705, %v704
  %v750 = vpack.c.b16 %v707, %v706
  %v751 = vpack.c.b16 %v709, %v708
  %v752 = vpack.c.b16 %v711, %v710
  %v753 = vpack.c.b16 %v713, %v712
  %v754 = vpack.c.b16 %v715, %v714
  %v755 = vpack.c.b16 %v717, %v716
  %v756 = vpack.c.b16 %v719, %v718
  %v757 = vpack.c.b16 %v721, %v720
  %v758 = vpack.c.b16 %v723, %v722
  %v759 = vpack.c.b16 %v725, %v724
  %v760 = vpack.c.b16 %v727, %v726
  %v761 = vpack.c.b16 %v729, %v728
  %794 = vmatprep.subr.bf16.mxu0 0
  %795 = vmatpush1.bf16.msra.mxu0 %v730
  %796 = vmatprep.subr.bf16.mxu0 0
  %797 = vmatpush1.bf16.msra.mxu0 %v731
  %798 = vmatprep.subr.bf16.mxu0 0
  %799 = vmatpush1.bf16.msra.mxu0 %v732
  %800 = vmatprep.subr.bf16.mxu0 0
  %801 = vmatpush1.bf16.msra.mxu0 %v733
  %802 = vmatprep.subr.bf16.mxu0 0
  %803 = vmatpush1.bf16.msra.mxu0 %v734
  %804 = vmatprep.subr.bf16.mxu0 0
  %805 = vmatpush1.bf16.msra.mxu0 %v735
  %806 = vmatprep.subr.bf16.mxu0 0
  %807 = vmatpush1.bf16.msra.mxu0 %v736
  %808 = vmatprep.subr.bf16.mxu0 0
  %809 = vmatpush1.bf16.msra.mxu0 %v737
  %810 = vmatprep.subr.bf16.mxu0 0
  %811 = vmatpush1.bf16.msra.mxu0 %v738
  %812 = vmatprep.subr.bf16.mxu0 0
  %813 = vmatpush1.bf16.msra.mxu0 %v739
  %814 = vmatprep.subr.bf16.mxu0 0
  %815 = vmatpush1.bf16.msra.mxu0 %v740
  %816 = vmatprep.subr.bf16.mxu0 0
  %817 = vmatpush1.bf16.msra.mxu0 %v741
  %818 = vmatprep.subr.bf16.mxu0 0
  %819 = vmatpush1.bf16.msra.mxu0 %v742
  %820 = vmatprep.subr.bf16.mxu0 0
  %821 = vmatpush1.bf16.msra.mxu0 %v743
  %822 = vmatprep.subr.bf16.mxu0 0
  %823 = vmatpush1.bf16.msra.mxu0 %v744
  %824 = vmatprep.subr.bf16.mxu0 0
  %825 = vmatpush1.bf16.msra.mxu0 %v745
  %826 = vmatprep.mubr.bf16.mxu0 %v528
  %827 = vmatmul.mubr.bf16.gmra.mrb[0].mxu0 %v527
  %v828 = vpop.f32.mrb[0].mxu0
  %v829 = vadd.f32 %v600, %v828
  %v830 = vpop.f32.mrb[0].mxu0
  %v831 = vpop.f32.mrb[0].mxu0
  %v832 = vpop.f32.mrb[0].mxu0
  %833 = vdwg.mxu0
  %834 = vmatprep.subr.bf16.mxu0 0
  %835 = vmatpush1.bf16.msra.mxu0 %v746
  %836 = vmatprep.subr.bf16.mxu0 0
  %837 = vmatpush1.bf16.msra.mxu0 %v747
  %838 = vmatprep.subr.bf16.mxu0 0
  %839 = vmatpush1.bf16.msra.mxu0 %v748
  %840 = vmatprep.subr.bf16.mxu0 0
  %841 = vmatpush1.bf16.msra.mxu0 %v749
  %842 = vmatprep.subr.bf16.mxu0 0
  %843 = vmatpush1.bf16.msra.mxu0 %v750
  %844 = vmatprep.subr.bf16.mxu0 0
  %845 = vmatpush1.bf16.msra.mxu0 %v751
  %846 = vmatprep.subr.bf16.mxu0 0
  %847 = vmatpush1.bf16.msra.mxu0 %v752
  %848 = vmatprep.subr.bf16.mxu0 0
  %849 = vmatpush1.bf16.msra.mxu0 %v753
  %850 = vmatprep.subr.bf16.mxu0 0
  %851 = vmatpush1.bf16.msra.mxu0 %v754
  %852 = vmatprep.subr.bf16.mxu0 0
  %853 = vmatpush1.bf16.msra.mxu0 %v755
  %854 = vmatprep.subr.bf16.mxu0 0
  %855 = vmatpush1.bf16.msra.mxu0 %v756
  %856 = vmatprep.subr.bf16.mxu0 0
  %857 = vmatpush1.bf16.msra.mxu0 %v757
  %858 = vmatprep.subr.bf16.mxu0 0
  %859 = vmatpush1.bf16.msra.mxu0 %v758
  %860 = vmatprep.subr.bf16.mxu0 0
  %861 = vmatpush1.bf16.msra.mxu0 %v759
  %862 = vmatprep.subr.bf16.mxu0 0
  %863 = vmatpush1.bf16.msra.mxu0 %v760
  %864 = vmatprep.subr.bf16.mxu0 0
  %865 = vmatpush1.bf16.msra.mxu0 %v761
  %866 = vmatprep.mubr.bf16.mxu0 %v530
  %867 = vmatmul.mubr.bf16.gmra.mrb[0].mxu0 %v529
  %v868 = vpop.f32.mrb[0].mxu0
  %v869 = vadd.f32 %v829, %v868
  %v870 = vpop.f32.mrb[0].mxu0
  %v871 = vpop.f32.mrb[0].mxu0
  %v872 = vpop.f32.mrb[0].mxu0
  %873 = vdwg.mxu0
  %874 = vst [vmem:[%s5] sm:$0x3] %v869
  // Predicated region
  $region22: #{tabular_model.1} parent=0 // pred_check
    _
  $region23: #{tabular_model.1} parent=0 // pred_check_branch
    %876 = sbr.rel (0) target = $region25
  $region24: #{tabular_model.1} parent=0 // pred_region
    _
  $region25: #{tabular_model.1} parent=0 // pred_fallthru
    _
  // Predicated region
  $region26: #{tabular_model.1} parent=0 // pred_check
    _
  $region27: #{tabular_model.1} parent=0 // pred_check_branch
    %878 = sbr.rel (0) target = $region29
  $region28: #{tabular_model.1} parent=0 // pred_region
    _
  $region29: #{tabular_model.1} parent=0 // pred_fallthru
    _

</llo_original>
